<compile_context>
chip_gen: v5e
topology: v5e:2x2
jax: 0.10.0
libtpu: 0.0.40
codegen_flags: <defaults>
</compile_context>

<pallas_src>
import functools

import jax
import jax.numpy as jnp
import numpy as np
from jax import lax
from jax.experimental import pallas as pl
from jax.experimental.pallas import tpu as pltpu


def _window_attention_kernel(x_ref, w_qkv_ref, b_qkv_ref, w_proj_ref,
                             b_proj_ref, bias_ref, o_ref,
                             qkv_ref, attn_ref,
                             *, num_heads, windows_per_block, window_tokens):
    # x_ref:      (Bw*N, C)   bf16, Bw windows' tokens flattened along rows
    # w_qkv_ref:  (C, 3C)     bf16 qkv weight (pre-transposed, q cols pre-scaled)
    # b_qkv_ref:  (1, 3C)     f32 qkv bias (q slice pre-scaled)
    # w_proj_ref: (C, C)      bf16
    # b_proj_ref: (1, C)      f32
    # bias_ref:   (H, N, N)   f32 relative position bias (precomputed gather)
    # o_ref:      (Bw*N, C)
    # qkv_ref:    (Bw*N, 3C)  f32 VMEM scratch (QKV projection result)
    # attn_ref:   (Bw*N, C)   bf16 VMEM scratch (per-window attention output)
    H = num_heads
    N = window_tokens
    Bw = windows_per_block
    C = o_ref.shape[1]
    hd = C // H

    # Batched QKV projection on the MXU (bf16 inputs, f32 accumulation),
    # written straight into VMEM scratch so the (Bw*N, 3C) value is never a
    # live register value across the per-window loop.
    qkv_ref[...] = (jnp.dot(x_ref[...], w_qkv_ref[...],
                            preferred_element_type=jnp.float32)
                    + b_qkv_ref[...])

    def window_body(w, carry):
        r0 = pl.multiple_of(w * N, 8)          # sublane-aligned row offset
        head_outs = []
        for h in range(H):                     # small static head loop
            c0 = h * hd
            q = qkv_ref[pl.ds(r0, N), c0:c0 + hd]               # (N, hd), scale folded in
            k = qkv_ref[pl.ds(r0, N), C + c0:C + c0 + hd]       # (N, hd)
            v = qkv_ref[pl.ds(r0, N), 2 * C + c0:2 * C + c0 + hd]

            # attn[n, m] = sum_d q[n, d] * k[m, d]
            s = lax.dot_general(q, k, (((1,), (1,)), ((), ())),
                                preferred_element_type=jnp.float32)   # (N, N)
            s = s + bias_ref[h]                # per-head bias load (cheap vld)

            # numerically stable softmax over the last axis (f32)
            s = s - jnp.max(s, axis=-1, keepdims=True)
            p = jnp.exp(s)
            p = p * pl.reciprocal(jnp.sum(p, axis=-1, keepdims=True),
                                  approx=True)

            # out[n, d] = sum_m attn[n, m] * v[m, d] (bf16 MXU, f32 acc)
            head_outs.append(jnp.dot(p.astype(jnp.bfloat16),
                                     v.astype(jnp.bfloat16),
                                     preferred_element_type=jnp.float32))

        # One lane-dense (N, C) store per window (no masked hd-wide stores).
        attn_ref[pl.ds(r0, N), :] = jnp.concatenate(
            head_outs, axis=-1).astype(attn_ref.dtype)
        return carry

    lax.fori_loop(0, Bw, window_body, 0)

    # Batched output projection: (Bw*N, C) @ (C, C), bf16 MXU, f32 acc.
    out = jnp.dot(attn_ref[...], w_proj_ref[...],
                  preferred_element_type=jnp.float32) + b_proj_ref[...]
    o_ref[...] = out.astype(o_ref.dtype)


def _block_vmem_bytes(bw, N, C, H):
    """VMEM footprint for one grid step (incl. weights + double buffering)."""
    rows = bw * N
    x_in = 2 * rows * C * 2                 # bf16 x block, double-buffered
    out = 2 * rows * C * 4                  # f32 out block, double-buffered
    qkv_s = rows * 3 * C * 4                # f32 qkv scratch
    attn_s = rows * C * 2                   # bf16 attn scratch
    weights = 2 * (C * 3 * C + C * C) * 2   # bf16 weights, double-buffered
    biases = 2 * (3 * C + C) * 4            # f32 biases, double-buffered
    relb = 2 * H * N * N * 4                # f32 rel-pos bias, double-buffered
    return x_in + out + qkv_s + attn_s + weights + biases + relb


def _vmem_budget_bytes():
    """Conservative per-step activation budget (v7x has only 64 MiB VMEM)."""
    try:
        cap = pltpu.get_tpu_info().vmem_capacity_bytes
    except Exception:
        cap = 64 << 20
    return int(min(cap // 4, 24 << 20))


def _choose_windows_per_block(B_, N, C, H, budget_bytes):
    """Largest Bw dividing B_ that fits the VMEM budget while keeping at least
    2 grid steps per TensorCore (>= 4 total) so the auto-pipeline can prefetch;
    prefers MXU-friendly row counts (multiples of 128)."""
    divisors = [d for d in range(1, B_ + 1) if B_ % d == 0]
    feasible = [d for d in divisors if _block_vmem_bytes(d, N, C, H) <= budget_bytes]
    if not feasible:
        feasible = [1]                       # never fall back to the whole array
    pipelined = ([d for d in feasible if B_ // d >= 4]
                 or [d for d in feasible if B_ // d >= 2]
                 or feasible)
    aligned = [d for d in pipelined if (d * N) % 128 == 0]
    return max(aligned) if aligned else max(pipelined)


def window_attention(x, w_qkv_t, b_qkv, w_proj_t, b_proj, rel_bias,
                     *, num_heads, scale):
    """x: (B_, N, C); returns (B_, N, C)."""
    B_, N, C = x.shape
    H = num_heads
    assert C % H == 0
    # TODO(synk): pad N to a multiple of 8 (e.g. Swin N=49 -> 56) and mask the
    # pad rows out of the softmax/output when window_tokens is not aligned.
    assert N % 8 == 0, "window token count must be a multiple of 8 (pad upstream)"

    # Fold the softmax scale into the q projection (one-time, outside kernel),
    # then cast the MXU operands to bf16 (kernel accumulates in f32).
    scale = jnp.float32(scale)
    w_qkv_scaled = w_qkv_t.astype(jnp.float32).at[:, :C].multiply(scale)
    b_qkv_scaled = b_qkv.astype(jnp.float32).at[:, :C].multiply(scale)
    w_qkv_bf16 = w_qkv_scaled.astype(jnp.bfloat16)       # (C, 3C)
    w_proj_bf16 = w_proj_t.astype(jnp.bfloat16)          # (C, C)
    x2d = x.reshape(B_ * N, C).astype(jnp.bfloat16)      # (B_*N, C)

    budget = _vmem_budget_bytes()
    Bw = _choose_windows_per_block(B_, N, C, H, budget)
    rows = Bw * N
    grid = (B_ // Bw,)
    est = _block_vmem_bytes(Bw, N, C, H)
    vmem_limit = int(min(32 << 20, max(16 << 20, 2 * est)))

    kernel = functools.partial(_window_attention_kernel,
                               num_heads=H,
                               windows_per_block=Bw,
                               window_tokens=N)

    out2d = pl.pallas_call(
        kernel,
        out_shape=jax.ShapeDtypeStruct((B_ * N, C), x.dtype),
        grid_spec=pltpu.PrefetchScalarGridSpec(
            num_scalar_prefetch=0,
            grid=grid,
            in_specs=[
                pl.BlockSpec((rows, C), lambda b: (b, 0)),        # x (Bw windows)
                pl.BlockSpec((C, 3 * C), lambda b: (0, 0)),       # qkv weight (bf16)
                pl.BlockSpec((1, 3 * C), lambda b: (0, 0)),       # qkv bias (f32)
                pl.BlockSpec((C, C), lambda b: (0, 0)),           # proj weight (bf16)
                pl.BlockSpec((1, C), lambda b: (0, 0)),           # proj bias (f32)
                pl.BlockSpec((H, N, N), lambda b: (0, 0, 0)),     # rel pos bias
            ],
            out_specs=pl.BlockSpec((rows, C), lambda b: (b, 0)),
            scratch_shapes=[
                pltpu.VMEM((rows, 3 * C), jnp.float32),   # qkv projection result
                pltpu.VMEM((rows, C), jnp.bfloat16),      # per-window attn output
            ],
        ),
        compiler_params=pltpu.CompilerParams(
            dimension_semantics=("parallel",),
            vmem_limit_bytes=vmem_limit),
    )(x2d, w_qkv_bf16, b_qkv_scaled, w_proj_bf16,
      b_proj.astype(jnp.float32), rel_bias.astype(jnp.float32))

    return out2d.reshape(B_, N, C)


def make_relative_position_index(window_size):
    """Replicates the PyTorch buffer construction (pure numpy glue)."""
    Wh, Ww = window_size
    coords_h = np.arange(Wh)
    coords_w = np.arange(Ww)
    coords = np.stack(np.meshgrid(coords_h, coords_w, indexing="ij"))  # (2, Wh, Ww)
    coords_flatten = coords.reshape(2, -1)                             # (2, N)
    relative_coords = coords_flatten[:, :, None] - coords_flatten[:, None, :]
    relative_coords = relative_coords.transpose(1, 2, 0)               # (N, N, 2)
    relative_coords[:, :, 0] += Wh - 1
    relative_coords[:, :, 1] += Ww - 1
    relative_coords[:, :, 0] *= 2 * Ww - 1
    return relative_coords.sum(-1)                                     # (N, N)


def reference_window_attention(x, w_qkv_t, b_qkv, w_proj_t, b_proj, rel_bias,
                               *, num_heads, scale):
    """Pure-JAX f32 reference mirroring the PyTorch forward (mask=None)."""
    B_, N, C = x.shape
    H = num_heads
    hd = C // H
    qkv = x @ w_qkv_t + b_qkv[0]                                       # (B_, N, 3C)
    qkv = qkv.reshape(B_, N, 3, H, hd).transpose(2, 0, 3, 1, 4)
    q, k, v = qkv[0], qkv[1], qkv[2]                                   # (B_, H, N, hd)
    q = q * scale
    attn = jnp.einsum("bhnd,bhmd->bhnm", q, k) + rel_bias[None]
    attn = jax.nn.softmax(attn, axis=-1)
    out = jnp.einsum("bhnm,bhmd->bhnd", attn, v)
    out = out.transpose(0, 2, 1, 3).reshape(B_, N, C)
    return out @ w_proj_t + b_proj[0]


if __name__ == "__main__":
    # Small, module-consistent shapes.
    dim = 32
    num_heads = 4
    window_size = (4, 4)
    N = window_size[0] * window_size[1]      # 16 tokens per window
    batch = 2
    num_windows = 4
    B_ = batch * num_windows                 # 8
    head_dim = dim // num_heads
    scale = head_dim ** (-0.5)

    key = jax.random.PRNGKey(0)
    k_x, k_rpb, k_wqkv, k_bqkv, k_wproj, k_bproj = jax.random.split(key, 6)

    x = jax.random.normal(k_x, (B_, N, dim), dtype=jnp.float32)

    # Deterministic parameter init (std=0.02 "trunc_normal"-like for the bias table).
    num_rel = (2 * window_size[0] - 1) * (2 * window_size[1] - 1)
    rel_pos_bias_table = 0.02 * jax.random.normal(
        k_rpb, (num_rel, num_heads), dtype=jnp.float32)
    w_qkv = 0.05 * jax.random.normal(k_wqkv, (3 * dim, dim), dtype=jnp.float32)
    b_qkv = 0.05 * jax.random.normal(k_bqkv, (1, 3 * dim), dtype=jnp.float32)
    w_proj = 0.05 * jax.random.normal(k_wproj, (dim, dim), dtype=jnp.float32)
    b_proj = 0.05 * jax.random.normal(k_bproj, (1, dim), dtype=jnp.float32)

    # Pre-transposed weights so the kernel computes x @ W + b
    # (PyTorch Linear: x @ W^T + b).
    w_qkv_t = w_qkv.T                      # (dim, 3*dim)
    w_proj_t = w_proj.T                    # (dim, dim)

    # Precompute relative position bias gather (glue, stays in plain JAX).
    rel_index = jnp.asarray(make_relative_position_index(window_size))   # (N, N)
    rel_bias = rel_pos_bias_table[rel_index.reshape(-1)]                 # (N*N, H)
    rel_bias = rel_bias.reshape(N, N, num_heads).transpose(2, 0, 1)      # (H, N, N)
    rel_bias = jnp.asarray(rel_bias)

    out = window_attention(x, w_qkv_t, b_qkv, w_proj_t, b_proj, rel_bias,
                           num_heads=num_heads, scale=scale)
    out = jax.block_until_ready(out)

    ref = reference_window_attention(x, w_qkv_t, b_qkv, w_proj_t, b_proj,
                                     rel_bias, num_heads=num_heads, scale=scale)
    ref = jax.block_until_ready(ref)

    assert out.shape == (B_, N, dim)
    # bf16 MXU inputs + approx reciprocal in the softmax denominator => looser
    # tolerance than a pure-f32 comparison.
    np.testing.assert_allclose(np.asarray(out), np.asarray(ref),
                               rtol=2e-2, atol=1e-2)
    print("KERNEL_OK")
</pallas_src>

<mosaic_0001>
module attributes {stable_mosaic.version = 11 : i64} {
  func.func @_window_attention_kernel(%arg0: i32, %arg1: memref<32x32xbf16, #tpu.memory_space<vmem>>, %arg2: memref<32x96xbf16, #tpu.memory_space<vmem>>, %arg3: memref<1x96xf32, #tpu.memory_space<vmem>>, %arg4: memref<32x32xbf16, #tpu.memory_space<vmem>>, %arg5: memref<1x32xf32, #tpu.memory_space<vmem>>, %arg6: memref<4x16x16xf32, #tpu.memory_space<vmem>>, %arg7: memref<32x32xf32, #tpu.memory_space<vmem>>, %arg8: memref<32x96xf32, #tpu.memory_space<vmem>>, %arg9: memref<32x32xbf16, #tpu.memory_space<vmem>>) attributes {dimension_semantics = [#tpu.dimension_semantics<parallel>], iteration_bounds = array<i64: 4>, scalar_prefetch = 0 : i64, scratch_operands = 2 : i64, tpu.core_type = #tpu.core_type<tc>, window_params = [{transform_indices = @transform_0, window_bounds = array<i64: 32, 32>}, {pipeline_mode = #tpu.pipeline_mode<synchronous>, transform_indices = @transform_1, window_bounds = array<i64: 32, 96>}, {pipeline_mode = #tpu.pipeline_mode<synchronous>, transform_indices = @transform_2, window_bounds = array<i64: 1, 96>}, {pipeline_mode = #tpu.pipeline_mode<synchronous>, transform_indices = @transform_3, window_bounds = array<i64: 32, 32>}, {pipeline_mode = #tpu.pipeline_mode<synchronous>, transform_indices = @transform_4, window_bounds = array<i64: 1, 32>}, {pipeline_mode = #tpu.pipeline_mode<synchronous>, transform_indices = @transform_5, window_bounds = array<i64: 4, 16, 16>}, {transform_indices = @transform_6, window_bounds = array<i64: 32, 32>}]} {
    %c0 = arith.constant 0 : index
    %c0_0 = arith.constant 0 : index
    %0 = vector.load %arg1[%c0, %c0_0] : memref<32x32xbf16, #tpu.memory_space<vmem>>, vector<32x32xbf16>
    %c0_1 = arith.constant 0 : index
    %c0_2 = arith.constant 0 : index
    %1 = vector.load %arg2[%c0_1, %c0_2] : memref<32x96xbf16, #tpu.memory_space<vmem>>, vector<32x96xbf16>
    %cst = arith.constant dense<0.000000e+00> : vector<32x96xf32>
    %2 = tpu.matmul %0, %1, %cst {dimension_numbers = #tpu.dot_dimension_numbers<[1], [0], [0], [1], [0, 0, 1, 1], [], []>} : vector<32x32xbf16>, vector<32x96xbf16>, vector<32x96xf32> -> vector<32x96xf32>
    %c0_3 = arith.constant 0 : index
    %c0_4 = arith.constant 0 : index
    %3 = vector.load %arg3[%c0_3, %c0_4] : memref<1x96xf32, #tpu.memory_space<vmem>>, vector<1x96xf32>
    %4 = vector.broadcast %3 : vector<1x96xf32> to vector<32x96xf32>
    %5 = arith.addf %2, %4 : vector<32x96xf32>
    %c0_5 = arith.constant 0 : index
    %c0_6 = arith.constant 0 : index
    %6 = vector.load %arg8[%c0_5, %c0_6] : memref<32x96xf32, #tpu.memory_space<vmem>>, vector<32x96xf32>
    tpu.vector_store %arg8[%c0_5, %c0_6], %5 {strides = array<i32>} : memref<32x96xf32, #tpu.memory_space<vmem>>, vector<32x96xf32>,
    %c0_i32 = arith.constant 0 : i32
    %c2_i32 = arith.constant 2 : i32
    %7 = arith.addi %c0_i32, %c2_i32 : i32
    %c1_i32 = arith.constant 1 : i32
    scf.for %arg10 = %c0_i32 to %7 step %c1_i32  : i32 {
      %c16_i32 = arith.constant 16 : i32
      %15 = arith.muli %arg10, %c16_i32 : i32
      %16 = tpu.assume_multiple %15, 8 : i32
      %17 = arith.index_cast %16 : i32 to index
      %c0_17 = arith.constant 0 : index
      %18 = vector.load %arg8[%17, %c0_17] : memref<32x96xf32, #tpu.memory_space<vmem>>, vector<16x8xf32>
      %19 = arith.index_cast %16 : i32 to index
      %c32 = arith.constant 32 : index
      %20 = vector.load %arg8[%19, %c32] : memref<32x96xf32, #tpu.memory_space<vmem>>, vector<16x8xf32>
      %21 = arith.index_cast %16 : i32 to index
      %c64 = arith.constant 64 : index
      %22 = vector.load %arg8[%21, %c64] : memref<32x96xf32, #tpu.memory_space<vmem>>, vector<16x8xf32>
      %cst_18 = arith.constant dense<0.000000e+00> : vector<16x16xf32>
      %23 = tpu.matmul %18, %20, %cst_18 {dimension_numbers = #tpu.dot_dimension_numbers<[1], [1], [0], [0], [0, 0, 1, 0], [], []>} : vector<16x8xf32>, vector<16x8xf32>, vector<16x16xf32> -> vector<16x16xf32>
      %c0_19 = arith.constant 0 : index
      %c0_20 = arith.constant 0 : index
      %c0_21 = arith.constant 0 : index
      %24 = vector.load %arg6[%c0_19, %c0_20, %c0_21] : memref<4x16x16xf32, #tpu.memory_space<vmem>>, vector<1x16x16xf32>
      %25 = vector.shape_cast %24 : vector<1x16x16xf32> to vector<16x16xf32>
      %26 = arith.addf %23, %25 : vector<16x16xf32>
      %cst_22 = arith.constant dense<0xFF800000> : vector<16xf32>
      %27 = vector.multi_reduction <maximumf>, %26, %cst_22 [1] : vector<16x16xf32> to vector<16xf32>
      %28 = vector.shape_cast %27 : vector<16xf32> to vector<16x1xf32>
      %29 = vector.broadcast %28 : vector<16x1xf32> to vector<16x16xf32>
      %30 = arith.subf %26, %29 : vector<16x16xf32>
      %31 = math.exp %30 : vector<16x16xf32>
      %cst_23 = arith.constant dense<0.000000e+00> : vector<16xf32>
      %32 = vector.multi_reduction <add>, %31, %cst_23 [1] : vector<16x16xf32> to vector<16xf32>
      %33 = vector.shape_cast %32 : vector<16xf32> to vector<16x1xf32>
      %34 = tpu.reciprocal %33 {approx = true} : vector<16x1xf32> -> vector<16x1xf32>
      %35 = vector.broadcast %34 : vector<16x1xf32> to vector<16x16xf32>
      %36 = arith.mulf %31, %35 : vector<16x16xf32>
      %37 = arith.truncf %36 : vector<16x16xf32> to vector<16x16xbf16>
      %38 = arith.truncf %22 : vector<16x8xf32> to vector<16x8xbf16>
      %cst_24 = arith.constant dense<0.000000e+00> : vector<16x8xf32>
      %39 = tpu.matmul %37, %38, %cst_24 {dimension_numbers = #tpu.dot_dimension_numbers<[1], [0], [0], [1], [0, 0, 1, 1], [], []>} : vector<16x16xbf16>, vector<16x8xbf16>, vector<16x8xf32> -> vector<16x8xf32>
      %40 = arith.index_cast %16 : i32 to index
      %c8 = arith.constant 8 : index
      %41 = vector.load %arg8[%40, %c8] : memref<32x96xf32, #tpu.memory_space<vmem>>, vector<16x8xf32>
      %42 = arith.index_cast %16 : i32 to index
      %c40 = arith.constant 40 : index
      %43 = vector.load %arg8[%42, %c40] : memref<32x96xf32, #tpu.memory_space<vmem>>, vector<16x8xf32>
      %44 = arith.index_cast %16 : i32 to index
      %c72 = arith.constant 72 : index
      %45 = vector.load %arg8[%44, %c72] : memref<32x96xf32, #tpu.memory_space<vmem>>, vector<16x8xf32>
      %cst_25 = arith.constant dense<0.000000e+00> : vector<16x16xf32>
      %46 = tpu.matmul %41, %43, %cst_25 {dimension_numbers = #tpu.dot_dimension_numbers<[1], [1], [0], [0], [0, 0, 1, 0], [], []>} : vector<16x8xf32>, vector<16x8xf32>, vector<16x16xf32> -> vector<16x16xf32>
      %c1 = arith.constant 1 : index
      %c0_26 = arith.constant 0 : index
      %c0_27 = arith.constant 0 : index
      %47 = vector.load %arg6[%c1, %c0_26, %c0_27] : memref<4x16x16xf32, #tpu.memory_space<vmem>>, vector<1x16x16xf32>
      %48 = vector.shape_cast %47 : vector<1x16x16xf32> to vector<16x16xf32>
      %49 = arith.addf %46, %48 : vector<16x16xf32>
      %cst_28 = arith.constant dense<0xFF800000> : vector<16xf32>
      %50 = vector.multi_reduction <maximumf>, %49, %cst_28 [1] : vector<16x16xf32> to vector<16xf32>
      %51 = vector.shape_cast %50 : vector<16xf32> to vector<16x1xf32>
      %52 = vector.broadcast %51 : vector<16x1xf32> to vector<16x16xf32>
      %53 = arith.subf %49, %52 : vector<16x16xf32>
      %54 = math.exp %53 : vector<16x16xf32>
      %cst_29 = arith.constant dense<0.000000e+00> : vector<16xf32>
      %55 = vector.multi_reduction <add>, %54, %cst_29 [1] : vector<16x16xf32> to vector<16xf32>
      %56 = vector.shape_cast %55 : vector<16xf32> to vector<16x1xf32>
      %57 = tpu.reciprocal %56 {approx = true} : vector<16x1xf32> -> vector<16x1xf32>
      %58 = vector.broadcast %57 : vector<16x1xf32> to vector<16x16xf32>
      %59 = arith.mulf %54, %58 : vector<16x16xf32>
      %60 = arith.truncf %59 : vector<16x16xf32> to vector<16x16xbf16>
      %61 = arith.truncf %45 : vector<16x8xf32> to vector<16x8xbf16>
      %cst_30 = arith.constant dense<0.000000e+00> : vector<16x8xf32>
      %62 = tpu.matmul %60, %61, %cst_30 {dimension_numbers = #tpu.dot_dimension_numbers<[1], [0], [0], [1], [0, 0, 1, 1], [], []>} : vector<16x16xbf16>, vector<16x8xbf16>, vector<16x8xf32> -> vector<16x8xf32>
      %63 = arith.index_cast %16 : i32 to index
      %c16 = arith.constant 16 : index
      %64 = vector.load %arg8[%63, %c16] : memref<32x96xf32, #tpu.memory_space<vmem>>, vector<16x8xf32>
      %65 = arith.index_cast %16 : i32 to index
      %c48 = arith.constant 48 : index
      %66 = vector.load %arg8[%65, %c48] : memref<32x96xf32, #tpu.memory_space<vmem>>, vector<16x8xf32>
      %67 = arith.index_cast %16 : i32 to index
      %c80 = arith.constant 80 : index
      %68 = vector.load %arg8[%67, %c80] : memref<32x96xf32, #tpu.memory_space<vmem>>, vector<16x8xf32>
      %cst_31 = arith.constant dense<0.000000e+00> : vector<16x16xf32>
      %69 = tpu.matmul %64, %66, %cst_31 {dimension_numbers = #tpu.dot_dimension_numbers<[1], [1], [0], [0], [0, 0, 1, 0], [], []>} : vector<16x8xf32>, vector<16x8xf32>, vector<16x16xf32> -> vector<16x16xf32>
      %c2 = arith.constant 2 : index
      %c0_32 = arith.constant 0 : index
      %c0_33 = arith.constant 0 : index
      %70 = vector.load %arg6[%c2, %c0_32, %c0_33] : memref<4x16x16xf32, #tpu.memory_space<vmem>>, vector<1x16x16xf32>
      %71 = vector.shape_cast %70 : vector<1x16x16xf32> to vector<16x16xf32>
      %72 = arith.addf %69, %71 : vector<16x16xf32>
      %cst_34 = arith.constant dense<0xFF800000> : vector<16xf32>
      %73 = vector.multi_reduction <maximumf>, %72, %cst_34 [1] : vector<16x16xf32> to vector<16xf32>
      %74 = vector.shape_cast %73 : vector<16xf32> to vector<16x1xf32>
      %75 = vector.broadcast %74 : vector<16x1xf32> to vector<16x16xf32>
      %76 = arith.subf %72, %75 : vector<16x16xf32>
      %77 = math.exp %76 : vector<16x16xf32>
      %cst_35 = arith.constant dense<0.000000e+00> : vector<16xf32>
      %78 = vector.multi_reduction <add>, %77, %cst_35 [1] : vector<16x16xf32> to vector<16xf32>
      %79 = vector.shape_cast %78 : vector<16xf32> to vector<16x1xf32>
      %80 = tpu.reciprocal %79 {approx = true} : vector<16x1xf32> -> vector<16x1xf32>
      %81 = vector.broadcast %80 : vector<16x1xf32> to vector<16x16xf32>
      %82 = arith.mulf %77, %81 : vector<16x16xf32>
      %83 = arith.truncf %82 : vector<16x16xf32> to vector<16x16xbf16>
      %84 = arith.truncf %68 : vector<16x8xf32> to vector<16x8xbf16>
      %cst_36 = arith.constant dense<0.000000e+00> : vector<16x8xf32>
      %85 = tpu.matmul %83, %84, %cst_36 {dimension_numbers = #tpu.dot_dimension_numbers<[1], [0], [0], [1], [0, 0, 1, 1], [], []>} : vector<16x16xbf16>, vector<16x8xbf16>, vector<16x8xf32> -> vector<16x8xf32>
      %86 = arith.index_cast %16 : i32 to index
      %c24 = arith.constant 24 : index
      %87 = vector.load %arg8[%86, %c24] : memref<32x96xf32, #tpu.memory_space<vmem>>, vector<16x8xf32>
      %88 = arith.index_cast %16 : i32 to index
      %c56 = arith.constant 56 : index
      %89 = vector.load %arg8[%88, %c56] : memref<32x96xf32, #tpu.memory_space<vmem>>, vector<16x8xf32>
      %90 = arith.index_cast %16 : i32 to index
      %c88 = arith.constant 88 : index
      %91 = vector.load %arg8[%90, %c88] : memref<32x96xf32, #tpu.memory_space<vmem>>, vector<16x8xf32>
      %cst_37 = arith.constant dense<0.000000e+00> : vector<16x16xf32>
      %92 = tpu.matmul %87, %89, %cst_37 {dimension_numbers = #tpu.dot_dimension_numbers<[1], [1], [0], [0], [0, 0, 1, 0], [], []>} : vector<16x8xf32>, vector<16x8xf32>, vector<16x16xf32> -> vector<16x16xf32>
      %c3 = arith.constant 3 : index
      %c0_38 = arith.constant 0 : index
      %c0_39 = arith.constant 0 : index
      %93 = vector.load %arg6[%c3, %c0_38, %c0_39] : memref<4x16x16xf32, #tpu.memory_space<vmem>>, vector<1x16x16xf32>
      %94 = vector.shape_cast %93 : vector<1x16x16xf32> to vector<16x16xf32>
      %95 = arith.addf %92, %94 : vector<16x16xf32>
      %cst_40 = arith.constant dense<0xFF800000> : vector<16xf32>
      %96 = vector.multi_reduction <maximumf>, %95, %cst_40 [1] : vector<16x16xf32> to vector<16xf32>
      %97 = vector.shape_cast %96 : vector<16xf32> to vector<16x1xf32>
      %98 = vector.broadcast %97 : vector<16x1xf32> to vector<16x16xf32>
      %99 = arith.subf %95, %98 : vector<16x16xf32>
      %100 = math.exp %99 : vector<16x16xf32>
      %cst_41 = arith.constant dense<0.000000e+00> : vector<16xf32>
      %101 = vector.multi_reduction <add>, %100, %cst_41 [1] : vector<16x16xf32> to vector<16xf32>
      %102 = vector.shape_cast %101 : vector<16xf32> to vector<16x1xf32>
      %103 = tpu.reciprocal %102 {approx = true} : vector<16x1xf32> -> vector<16x1xf32>
      %104 = vector.broadcast %103 : vector<16x1xf32> to vector<16x16xf32>
      %105 = arith.mulf %100, %104 : vector<16x16xf32>
      %106 = arith.truncf %105 : vector<16x16xf32> to vector<16x16xbf16>
      %107 = arith.truncf %91 : vector<16x8xf32> to vector<16x8xbf16>
      %cst_42 = arith.constant dense<0.000000e+00> : vector<16x8xf32>
      %108 = tpu.matmul %106, %107, %cst_42 {dimension_numbers = #tpu.dot_dimension_numbers<[1], [0], [0], [1], [0, 0, 1, 1], [], []>} : vector<16x16xbf16>, vector<16x8xbf16>, vector<16x8xf32> -> vector<16x8xf32>
      %109 = tpu.concatenate %39, %62, %85, %108 in 1 : vector<16x8xf32>, vector<16x8xf32>, vector<16x8xf32>, vector<16x8xf32> -> vector<16x32xf32>
      %110 = arith.truncf %109 : vector<16x32xf32> to vector<16x32xbf16>
      %111 = arith.index_cast %16 : i32 to index
      %c0_43 = arith.constant 0 : index
      %112 = vector.load %arg9[%111, %c0_43] : memref<32x32xbf16, #tpu.memory_space<vmem>>, vector<16x32xbf16>
      tpu.vector_store %arg9[%111, %c0_43], %110 {strides = array<i32>} : memref<32x32xbf16, #tpu.memory_space<vmem>>, vector<16x32xbf16>,
    }
    %c2_i32_7 = arith.constant 2 : i32
    %c0_8 = arith.constant 0 : index
    %c0_9 = arith.constant 0 : index
    %8 = vector.load %arg9[%c0_8, %c0_9] : memref<32x32xbf16, #tpu.memory_space<vmem>>, vector<32x32xbf16>
    %c0_10 = arith.constant 0 : index
    %c0_11 = arith.constant 0 : index
    %9 = vector.load %arg4[%c0_10, %c0_11] : memref<32x32xbf16, #tpu.memory_space<vmem>>, vector<32x32xbf16>
    %cst_12 = arith.constant dense<0.000000e+00> : vector<32x32xf32>
    %10 = tpu.matmul %8, %9, %cst_12 {dimension_numbers = #tpu.dot_dimension_numbers<[1], [0], [0], [1], [0, 0, 1, 1], [], []>} : vector<32x32xbf16>, vector<32x32xbf16>, vector<32x32xf32> -> vector<32x32xf32>
    %c0_13 = arith.constant 0 : index
    %c0_14 = arith.constant 0 : index
    %11 = vector.load %arg5[%c0_13, %c0_14] : memref<1x32xf32, #tpu.memory_space<vmem>>, vector<1x32xf32>
    %12 = vector.broadcast %11 : vector<1x32xf32> to vector<32x32xf32>
    %13 = arith.addf %10, %12 : vector<32x32xf32>
    %c0_15 = arith.constant 0 : index
    %c0_16 = arith.constant 0 : index
    %14 = vector.load %arg7[%c0_15, %c0_16] : memref<32x32xf32, #tpu.memory_space<vmem>>, vector<32x32xf32>
    tpu.vector_store %arg7[%c0_15, %c0_16], %13 {strides = array<i32>} : memref<32x32xf32, #tpu.memory_space<vmem>>, vector<32x32xf32>,
    return
  }
  func.func @transform_0(%arg0: i32) -> (i32, i32) {
    %c0_i32 = arith.constant 0 : i32
    %c0_i32_0 = arith.constant 0 : i32
    return %arg0, %c0_i32 : i32, i32
  }
  func.func @transform_1(%arg0: i32) -> (i32, i32) {
    %c0_i32 = arith.constant 0 : i32
    %c0_i32_0 = arith.constant 0 : i32
    %c0_i32_1 = arith.constant 0 : i32
    return %c0_i32, %c0_i32_0 : i32, i32
  }
  func.func @transform_2(%arg0: i32) -> (i32, i32) {
    %c0_i32 = arith.constant 0 : i32
    %c0_i32_0 = arith.constant 0 : i32
    %c0_i32_1 = arith.constant 0 : i32
    return %c0_i32, %c0_i32_0 : i32, i32
  }
  func.func @transform_3(%arg0: i32) -> (i32, i32) {
    %c0_i32 = arith.constant 0 : i32
    %c0_i32_0 = arith.constant 0 : i32
    %c0_i32_1 = arith.constant 0 : i32
    return %c0_i32, %c0_i32_0 : i32, i32
  }
  func.func @transform_4(%arg0: i32) -> (i32, i32) {
    %c0_i32 = arith.constant 0 : i32
    %c0_i32_0 = arith.constant 0 : i32
    %c0_i32_1 = arith.constant 0 : i32
    return %c0_i32, %c0_i32_0 : i32, i32
  }
  func.func @transform_5(%arg0: i32) -> (i32, i32, i32) {
    %c0_i32 = arith.constant 0 : i32
    %c0_i32_0 = arith.constant 0 : i32
    %c0_i32_1 = arith.constant 0 : i32
    %c0_i32_2 = arith.constant 0 : i32
    return %c0_i32, %c0_i32_0, %c0_i32_1 : i32, i32, i32
  }
  func.func @transform_6(%arg0: i32) -> (i32, i32) {
    %c0_i32 = arith.constant 0 : i32
    %c0_i32_0 = arith.constant 0 : i32
    return %arg0, %c0_i32 : i32, i32
  }
}

</mosaic_0001>

<llo_original>
// kernel: tpu_custom_call.1
$region0: #{tpu_custom_call.1}
  #allocation0 [shape = 'u32[]', space=smem, size = 0x4, offset = 0x4, fixed_abs, tag = 'smem constant byte address 0x4 - core index']
  #allocation1 [shape = 'u32[72,128]{1,0:T(1,128)}', space=vmem, size = 0x9000, scoped, tag = 'internal scratch']
  #allocation2 [shape = 'f32[32,96]{1,0:T(8,128)}', space=vmem, size = 0x4000, scoped, tag = 'scratch operand']
  #allocation3 [shape = 'bf16[32,32]{1,0:T(8,128)(2,1)}', space=vmem, size = 0x2000, scoped, tag = 'scratch operand']
  %s0 = inlined_call_operand.vmem [shape: bf16[128,32], index: 0, kind: input, shape index: {}]
  %s1 = inlined_call_operand.vmem [shape: bf16[32,96], index: 1, kind: input, shape index: {}]
  %s2 = inlined_call_operand.vmem [shape: f32[1,96], index: 2, kind: input, shape index: {}]
  %s3 = inlined_call_operand.hbm [shape: bf16[32,32], index: 3, kind: input, shape index: {}]
  %s4 = inlined_call_operand.vmem [shape: f32[1,32], index: 4, kind: input, shape index: {}]
  %s5 = inlined_call_operand.vmem [shape: f32[4,16,16], index: 5, kind: input, shape index: {}]
  %s6 = inlined_call_operand.vmem [shape: f32[128,32], index: 6, kind: output, shape index: {}]
  %s7 = sld [smem:[#allocation0]]
  $region68: #{tpu_custom_call.1} parent=0
    _
  %s9 = ssub.s32 1, %s7
  %s10 = scalar_select 0, %s9, %s7
  $region1: #{tpu_custom_call.1} parent=0
    #allocation4 [shape = 'u8[8192]{0}', space=vmem, size = 0x2000, scoped, tag = 'input window, operand 3, single buffered']
    #allocation5 [shape = 's32[2]{0}', space=sflag, size = 0x8, scoped, tag = 'scoped memory for tpu_custom_call.1']
    %11 = vsyncpa [#allocation5], 0
    loop: start=0, step=1, limit=6
    $region2: #{tpu_custom_call.1} parent=1 // loop_pre_header
      _
    $region3: #{tpu_custom_call.1} parent=1 // loop_header
      %s13 = sphi 0, %s17
      %p14 = scmp.ge.s32.totalorder %s13, 6
      %s23 = sphi 0, %s25
      %s26 = sphi 0, %s23
      %s27 = sphi 0, %s26
      %s43 = sphi 0, %s27
      %s47 = sphi 0, %s47
      %s49 = sphi 0, %s47
      %s50 = sphi 0, %s49
      %s64 = sphi 0, %s50
      %s68 = sphi 0, %s68
      %s70 = sphi 0, %s68
      %s71 = sphi 0, %s70
      %s85 = sphi 0, %s71
      %s89 = sphi 0, %s89
      %s91 = sphi 0, %s89
      %s92 = sphi 0, %s91
      %s106 = sphi 0, %s92
      %s110 = sphi 0, %s110
      %s112 = sphi 0, %s110
      %s113 = sphi 0, %s112
      %s127 = sphi 0, %s113
      %s131 = sphi 0, %s131
      %s133 = sphi 0, %s131
      %s134 = sphi 0, %s133
      %s148 = sphi 0, %s134
      %s154 = sphi 0, %s156
      %s157 = sphi 0, %s154
      %s158 = sphi 0, %s157
      %s174 = sphi 0, %s158
    $region4: #{tpu_custom_call.1} parent=1 // loop_header_branch
      %16 = sbr.rel (%p14) target = $region8
    $region5: #{tpu_custom_call.1} parent=1 // loop_body
      %s18 = ssub.s32 %s13, 1
      %s19 = ssub.s32 %s13, 2
      %s20 = sadd.s32 %s13, 1
      %s21 = ssub.s32 %s13, %s20
      %p22 = scmp.eq.s32.totalorder %s21, 0
      %s24 = sadd.s32 %s23, 1
      %s25 = scalar_select %p22, %s23, %s24
      %p28 = pneg %p22
      %p29 = scmp.eq.s32.totalorder %s13, 3
      %p30 = por %p28, %p29
      %p31 = scmp.ne.s32.totalorder %s23, %s26
      %p32 = scmp.eq.s32.totalorder %s13, 0
      %p33 = por %p31, %p32
      %p34 = scmp.ne.s32.totalorder %s23, %s26
      %p35 = scmp.eq.s32.totalorder %s18, 3
      %p36 = por %p34, %p35
      %p37 = scmp.ne.s32.totalorder %s26, %s27
      %p38 = scmp.eq.s32.totalorder %s18, 0
      %p39 = por %p37, %p38
      %p40 = scmp.ne.s32.totalorder %s26, %s27
      %p41 = scmp.eq.s32.totalorder %s19, 3
      %p42 = por %p40, %p41
      %p44 = scmp.ne.s32.totalorder %s27, %s43
      %p45 = scmp.eq.s32.totalorder %s19, 0
      %p46 = por %p44, %p45
      %s48 = sadd.s32 %s47, 1
      %p51 = scmp.eq.s32.totalorder %s13, 3
      %p52 = scmp.ne.s32.totalorder %s47, %s49
      %p53 = scmp.eq.s32.totalorder %s13, 0
      %p54 = por %p52, %p53
      %p55 = scmp.ne.s32.totalorder %s47, %s49
      %p56 = scmp.eq.s32.totalorder %s18, 3
      %p57 = por %p55, %p56
      %p58 = scmp.ne.s32.totalorder %s49, %s50
      %p59 = scmp.eq.s32.totalorder %s18, 0
      %p60 = por %p58, %p59
      %p61 = scmp.ne.s32.totalorder %s49, %s50
      %p62 = scmp.eq.s32.totalorder %s19, 3
      %p63 = por %p61, %p62
      %p65 = scmp.ne.s32.totalorder %s50, %s64
      %p66 = scmp.eq.s32.totalorder %s19, 0
      %p67 = por %p65, %p66
      %s69 = sadd.s32 %s68, 1
      %p72 = scmp.eq.s32.totalorder %s13, 3
      %p73 = scmp.ne.s32.totalorder %s68, %s70
      %p74 = scmp.eq.s32.totalorder %s13, 0
      %p75 = por %p73, %p74
      %p76 = scmp.ne.s32.totalorder %s68, %s70
      %p77 = scmp.eq.s32.totalorder %s18, 3
      %p78 = por %p76, %p77
      %p79 = scmp.ne.s32.totalorder %s70, %s71
      %p80 = scmp.eq.s32.totalorder %s18, 0
      %p81 = por %p79, %p80
      %p82 = scmp.ne.s32.totalorder %s70, %s71
      %p83 = scmp.eq.s32.totalorder %s19, 3
      %p84 = por %p82, %p83
      %p86 = scmp.ne.s32.totalorder %s71, %s85
      %p87 = scmp.eq.s32.totalorder %s19, 0
      %p88 = por %p86, %p87
      %s90 = sadd.s32 %s89, 1
      %p93 = scmp.eq.s32.totalorder %s13, 3
      %p94 = scmp.ne.s32.totalorder %s89, %s91
      %p95 = scmp.eq.s32.totalorder %s13, 0
      %p96 = por %p94, %p95
      %p97 = scmp.ne.s32.totalorder %s89, %s91
      %p98 = scmp.eq.s32.totalorder %s18, 3
      %p99 = por %p97, %p98
      %p100 = scmp.ne.s32.totalorder %s91, %s92
      %p101 = scmp.eq.s32.totalorder %s18, 0
      %p102 = por %p100, %p101
      %p103 = scmp.ne.s32.totalorder %s91, %s92
      %p104 = scmp.eq.s32.totalorder %s19, 3
      %p105 = por %p103, %p104
      %p107 = scmp.ne.s32.totalorder %s92, %s106
      %p108 = scmp.eq.s32.totalorder %s19, 0
      %p109 = por %p107, %p108
      %s111 = sadd.s32 %s110, 1
      %p114 = scmp.eq.s32.totalorder %s13, 3
      %p115 = scmp.ne.s32.totalorder %s110, %s112
      %p116 = scmp.eq.s32.totalorder %s13, 0
      %p117 = por %p115, %p116
      %p118 = scmp.ne.s32.totalorder %s110, %s112
      %p119 = scmp.eq.s32.totalorder %s18, 3
      %p120 = por %p118, %p119
      %p121 = scmp.ne.s32.totalorder %s112, %s113
      %p122 = scmp.eq.s32.totalorder %s18, 0
      %p123 = por %p121, %p122
      %p124 = scmp.ne.s32.totalorder %s112, %s113
      %p125 = scmp.eq.s32.totalorder %s19, 3
      %p126 = por %p124, %p125
      %p128 = scmp.ne.s32.totalorder %s113, %s127
      %p129 = scmp.eq.s32.totalorder %s19, 0
      %p130 = por %p128, %p129
      %s132 = sadd.s32 %s131, 1
      %p135 = scmp.eq.s32.totalorder %s13, 3
      %p136 = scmp.ne.s32.totalorder %s131, %s133
      %p137 = scmp.eq.s32.totalorder %s13, 0
      %p138 = por %p136, %p137
      %p139 = scmp.ne.s32.totalorder %s131, %s133
      %p140 = scmp.eq.s32.totalorder %s18, 3
      %p141 = por %p139, %p140
      %p142 = scmp.ne.s32.totalorder %s133, %s134
      %p143 = scmp.eq.s32.totalorder %s18, 0
      %p144 = por %p142, %p143
      %p145 = scmp.ne.s32.totalorder %s133, %s134
      %p146 = scmp.eq.s32.totalorder %s19, 3
      %p147 = por %p145, %p146
      %p149 = scmp.ne.s32.totalorder %s134, %s148
      %p150 = scmp.eq.s32.totalorder %s19, 0
      %p151 = por %p149, %p150
      %s152 = ssub.s32 %s13, %s20
      %p153 = scmp.eq.s32.totalorder %s152, 0
      %s155 = sadd.s32 %s154, 1
      %s156 = scalar_select %p153, %s154, %s155
      %p159 = pneg %p153
      %p160 = scmp.eq.s32.totalorder %s13, 3
      %p161 = por %p159, %p160
      %p162 = scmp.ne.s32.totalorder %s154, %s157
      %p163 = scmp.eq.s32.totalorder %s13, 0
      %p164 = por %p162, %p163
      %p165 = scmp.ne.s32.totalorder %s154, %s157
      %p166 = scmp.eq.s32.totalorder %s18, 3
      %p167 = por %p165, %p166
      %p168 = scmp.ne.s32.totalorder %s157, %s158
      %p169 = scmp.eq.s32.totalorder %s18, 0
      %p170 = por %p168, %p169
      %p171 = scmp.ne.s32.totalorder %s157, %s158
      %p172 = scmp.eq.s32.totalorder %s19, 3
      %p173 = por %p171, %p172
      %p175 = scmp.ne.s32.totalorder %s158, %s174
      %p176 = scmp.eq.s32.totalorder %s19, 0
      %p177 = por %p175, %p176
      %p178 = scmp.le.s32.totalorder 1, %s13
      %p179 = scmp.lt.s32.totalorder %s13, 5
      %p180 = pnand %p178, %p179
      %p181 = pneg %p180
      // Predicated region
      $region9: #{tpu_custom_call.1} parent=5 // pred_check
        _
      $region10: #{tpu_custom_call.1} parent=5 // pred_check_branch
        %183 = sbr.rel (%p180) target = $region12
      $region11: #{tpu_custom_call.1} parent=5 // pred_region
        %s184 = ssub.s32 %s13, 1
        // Predicated region
        $region13: #{tpu_custom_call.1} parent=11 // pred_check
          %p185 = pneg %p60
        $region14: #{tpu_custom_call.1} parent=11 // pred_check_branch
          %187 = sbr.rel (%p185) target = $region16
        $region15: #{tpu_custom_call.1} parent=11 // pred_region
          _
        $region16: #{tpu_custom_call.1} parent=11 // pred_fallthru
          _
        // Predicated region
        $region17: #{tpu_custom_call.1} parent=11 // pred_check
          %p188 = pneg %p81
        $region18: #{tpu_custom_call.1} parent=11 // pred_check_branch
          %190 = sbr.rel (%p188) target = $region20
        $region19: #{tpu_custom_call.1} parent=11 // pred_region
          _
        $region20: #{tpu_custom_call.1} parent=11 // pred_fallthru
          _
        // Predicated region
        $region21: #{tpu_custom_call.1} parent=11 // pred_check
          %p191 = pneg %p102
        $region22: #{tpu_custom_call.1} parent=11 // pred_check_branch
          %193 = sbr.rel (%p191) target = $region24
        $region23: #{tpu_custom_call.1} parent=11 // pred_region
          %195 = vsyncadd [#allocation5], 0
          %s196 = sshll.u32 %s3, 4
          %s197 = int_to_ptr.hbm [resolvable:$true] %s196
          %s198 = sshll.u32 [#allocation4], 4
          %s199 = int_to_ptr.vmem [resolvable:$true] %s198
          %204 = dma.hbm_to_vmem [thread:$0]  %s197, 256, %s199, [#allocation5], 64, 64, 4
        $region24: #{tpu_custom_call.1} parent=11 // pred_fallthru
          _
        // Predicated region
        $region25: #{tpu_custom_call.1} parent=11 // pred_check
          %p205 = pneg %p123
        $region26: #{tpu_custom_call.1} parent=11 // pred_check_branch
          %207 = sbr.rel (%p205) target = $region28
        $region27: #{tpu_custom_call.1} parent=11 // pred_region
          _
        $region28: #{tpu_custom_call.1} parent=11 // pred_fallthru
          _
        // Predicated region
        $region29: #{tpu_custom_call.1} parent=11 // pred_check
          %p208 = pneg %p144
        $region30: #{tpu_custom_call.1} parent=11 // pred_check_branch
          %210 = sbr.rel (%p208) target = $region32
        $region31: #{tpu_custom_call.1} parent=11 // pred_region
          _
        $region32: #{tpu_custom_call.1} parent=11 // pred_fallthru
          _
      $region12: #{tpu_custom_call.1} parent=5 // pred_fallthru
        _
      %p211 = scmp.lt.s32.totalorder %s13, 4
      // Predicated region
      $region33: #{tpu_custom_call.1} parent=5 // pred_check
        %p212 = pneg %p211
      $region34: #{tpu_custom_call.1} parent=5 // pred_check_branch
        %214 = sbr.rel (%p212) target = $region36
      $region35: #{tpu_custom_call.1} parent=5 // pred_region
        // Predicated region
        $region37: #{tpu_custom_call.1} parent=35 // pred_check
          %p215 = pneg %p33
        $region38: #{tpu_custom_call.1} parent=35 // pred_check_branch
          %217 = sbr.rel (%p215) target = $region40
        $region39: #{tpu_custom_call.1} parent=35 // pred_region
          %s218 = smul.u32 4, %s13
          %p219 = scmp.lt.s32.totalorder %s218, 15
          %s220 = scalar_select %p219, %s218, 15
          %s221 = smul.addr %s220, 4
          %s222 = scalar_lea.vmem %s0, %s221
          %s223 = smul.u32 4, %s13
        $region40: #{tpu_custom_call.1} parent=35 // pred_fallthru
          _
      $region36: #{tpu_custom_call.1} parent=5 // pred_fallthru
        _
      %p224 = scmp.le.s32.totalorder 1, %s13
      %p225 = scmp.lt.s32.totalorder %s13, 5
      %p226 = pnand %p224, %p225
      %p227 = pneg %p226
      // Predicated region
      $region41: #{tpu_custom_call.1} parent=5 // pred_check
        _
      $region42: #{tpu_custom_call.1} parent=5 // pred_check_branch
        %229 = sbr.rel (%p226) target = $region44
      $region43: #{tpu_custom_call.1} parent=5 // pred_region
        %s230 = ssub.s32 %s13, 1
        // Predicated region
        $region45: #{tpu_custom_call.1} parent=43 // pred_check
          %p231 = pneg %p102
        $region46: #{tpu_custom_call.1} parent=43 // pred_check_branch
          %233 = sbr.rel (%p231) target = $region48
        $region47: #{tpu_custom_call.1} parent=43 // pred_region
          %235 = dma.done [#allocation5], 256
        $region48: #{tpu_custom_call.1} parent=43 // pred_fallthru
          _
        %s236 = smul.u32 4, %s18
        %p237 = scmp.lt.s32.totalorder %s236, 15
        %s238 = scalar_select %p237, %s236, 15
        %s239 = smul.addr %s238, 4
        %s240 = scalar_lea.vmem %s0, %s239
        %p241 = pneg %p39
        %p242 = pneg %p36
        %p243 = pneg %p60
        %p244 = pneg %p57
        %p245 = pneg %p81
        %p246 = pneg %p78
        %p247 = pneg %p102
        %p248 = pneg %p99
        %p249 = pneg %p123
        %p250 = pneg %p120
        %p251 = pneg %p144
        %p252 = pneg %p141
        %p253 = pneg %p170
        %p254 = pneg %p167
        %s255 = smul.u32 4, %s18
        %p256 = scmp.lt.s32.totalorder %s255, 15
        %s257 = scalar_select %p256, %s255, 15
        %s258 = smul.addr %s257, 8
        %s259 = scalar_lea.vmem %s6, %s258
        %s260 = smul.u32 4, %s18
        %p261 = scmp.lt.s32.totalorder %s260, 15
        %s262 = scalar_select %p261, %s260, 15
        %s263 = smul.addr %s262, 4
        %s264 = scalar_lea.vmem %s0, %s263
        %s265 = smul.u32 4, %s18
        %s266 = smul.u32 4, %s18
        %p267 = scmp.lt.s32.totalorder %s266, 15
        %s268 = scalar_select %p267, %s266, 15
        %s269 = smul.addr %s268, 8
        %s270 = scalar_lea.vmem %s6, %s269
        %s271 = smul.u32 4, %s18
        %v273 = vld [vmem:[%s264] sm:$0xf]
        %v274 = vld [vmem:[%s264 + $0x4] sm:$0xf]
        %v275 = vld [vmem:[%s264 + $0x8] sm:$0xf]
        %v276 = vld [vmem:[%s264 + $0xc] sm:$0xf]
        %v277 = vld [vmem:[%s1] sm:$0xf]
        %v278 = vld [vmem:[%s1 + $0x4] sm:$0xf]
        %v279 = vld [vmem:[%s1 + $0x8] sm:$0xf]
        %v280 = vld [vmem:[%s1 + $0xc] sm:$0xf]
        %v281 = vld [vmem:[%s2] sm:$0x1]
        %v283 = vperm.slane %v281, 0
        %v289 = vunpack.c.l.b16 %v273
        %v290 = vunpack.c.l.b16 %v274
        %v291 = vunpack.c.l.b16 %v275
        %v292 = vunpack.c.l.b16 %v276
        %v293 = vpack.c.b16 %v290, %v289
        %v294 = vpack.c.b16 %v292, %v291
        %v299 = vunpack.c.l.b16 %v277
        %v300 = vunpack.c.l.b16 %v278
        %v301 = vunpack.c.l.b16 %v279
        %v302 = vunpack.c.l.b16 %v280
        %v303 = vpack.c.b16 %v300, %v299
        %v304 = vpack.c.b16 %v302, %v301
        %vm307 = vcmask 261120
        %v309 = vsel %vm307, %v293, 0
        %v312 = vsel %vm307, %v294, 0
        %314 = vmatpush.bf16.msra.mxu0 0
        %315 = vmatpush.bf16.msra.mxu0 0
        %316 = vmatpush.bf16.msra.mxu0 0
        %317 = vmatpush.bf16.msra.mxu0 0
        %318 = vmatpush.bf16.msra.mxu0 0
        %319 = vmatpush.bf16.msra.mxu0 0
        %320 = vmatpush.bf16.msra.mxu0 %v304
        %321 = vmatpush.bf16.msra.mxu0 %v303
        %322 = vmatmul.bf16.gmra.mxu0 %v309
        %v323 = vpop.f32.mrf.mxu0
        %v324 = vadd.f32 %v283, %v323
        %v325 = vpop.f32.mrf.mxu0
        %v326 = vadd.f32 %v283, %v325
        %327 = vmatmul.bf16.gmra.mxu0 %v312
        %v328 = vpop.f32.mrf.mxu0
        %v329 = vadd.f32 %v283, %v328
        %v330 = vpop.f32.mrf.mxu0
        %v331 = vadd.f32 %v283, %v330
        %332 = vdwg.mxu0
        %vm333 = vcmask 785408
        %334 = vst.msk [vmem:[#allocation2] sm:$0xff] %vm333, %v324
        %335 = vst.msk [vmem:[#allocation2 + $0x8] sm:$0xff] %vm333, %v326
        %336 = vst.msk [vmem:[#allocation2 + $0x10] sm:$0xff] %vm333, %v329
        %337 = vst.msk [vmem:[#allocation2 + $0x18] sm:$0xff] %vm333, %v331
        loop: start=0, step=1, limit=2
        $region49: #{tpu_custom_call.1} parent=43 // loop_pre_header
          _
        $region50: #{tpu_custom_call.1} parent=43 // loop_header
          %s339 = sphi 0, %s343
          %p340 = scmp.ge.s32.totalorder %s339, 2
        $region51: #{tpu_custom_call.1} parent=43 // loop_header_branch
          %342 = sbr.rel (%p340) target = $region55
        $region52: #{tpu_custom_call.1} parent=43 // loop_body
          %s344 = smul.u32 %s339, 16
          %s345 = scalar_lea.vmem [#allocation2], %s344
          %v346 = vld [vmem:[%s345] sm:$0xff]
          %v347 = vld [vmem:[%s345 + $0x8] sm:$0xff]
          %v348 = vld [vmem:[%s5] sm:$0xff]
          %v349 = vld [vmem:[%s5 + $0x8] sm:$0xff]
          %352 = vrot.lane.b32.xlu0 %v346, 96
          %v353 = vpop.permute.xlu0 %352
          %354 = vrot.lane.b32.xlu0 %v347, 96
          %v355 = vpop.permute.xlu0 %354
          %vm356 = vcmask 64512
          %v357 = vsel %vm356, %v346, 0
          %v359 = vsel %vm356, %v347, 0
          %v361 = vsel %vm356, %v353, 0
          %v363 = vsel %vm356, %v355, 0
          %365 = vmatpush.xpose.msra.mxu0 0.0
          %366 = vmatpush.xpose.msra.mxu0 0.0
          %367 = vmatpush.xpose.msra.mxu0 0.0
          %368 = vmatpush.xpose.msra.mxu0 0.0
          %369 = vmatpush.xpose.msra.mxu0 0.0
          %370 = vmatpush.xpose.msra.mxu0 0.0
          %371 = vmatpush.xpose.msra.mxu0 0.0
          %372 = vmatpush.xpose.msra.mxu0 0.0
          %373 = vmatpush.xpose.msra.mxu0 0.0
          %374 = vmatpush.xpose.msra.mxu0 0.0
          %375 = vmatpush.xpose.msra.mxu0 0.0
          %376 = vmatpush.xpose.msra.mxu0 0.0
          %377 = vmatpush.xpose.msra.mxu0 0.0
          %378 = vmatpush.xpose.msra.mxu0 0.0
          %379 = vmatpush.xpose.msra.mxu0 %v363
          %380 = vmatpush.xpose.msra.mxu0 %v361
          %381 = vmatmul.f32.gmra.mxu0 %v357
          %v382 = vpop.f32.mrf.mxu0
          %v383 = vadd.f32 %v348, %v382
          %384 = vmatmul.f32.gmra.mxu0 %v359
          %v385 = vpop.f32.mrf.mxu0
          %v386 = vadd.f32 %v349, %v385
          %387 = vdwg.mxu0
          %vm388 = vcmask 130048
          %v389 = vsel %vm388, %v383, -inf
          %390 = vmax.xlane.f32.xlu0 %v389
          %v391 = vpop.xlane.xlu0 %390
          %v392 = vsel %vm388, %v386, -inf
          %393 = vmax.xlane.f32.xlu0 %v392
          %v394 = vpop.xlane.xlu0 %393
          %v395 = vsub.f32 %v383, %v391
          %v396 = vsub.f32 %v386, %v394
          %v397 = vmul.f32 %v395, 1.442695
          %v398 = vpow.pop %v397
          %v399 = vmul.f32 %v396, 1.442695
          %v400 = vpow.pop %v399
          %v401 = vsel %vm388, %v398, 0.0
          %402 = vadd.xlane.f32.xlu0 %v401
          %v403 = vpop.xlane.xlu0 %402
          %v404 = vsel %vm388, %v400, 0.0
          %405 = vadd.xlane.f32.xlu0 %v404
          %v406 = vpop.xlane.xlu0 %405
          %v407 = vrcp.pop %v403
          %v408 = vrcp.pop %v406
          %v409 = vmul.f32 %v398, %v407
          %v410 = vmul.f32 %v400, %v408
          %v411 = vpack.c.bf16 %v410, %v409
          %v412 = vpack.c.bf16 %v347, %v346
          %414 = vrot.lane.b32.xlu0 %v412, 64
          %v415 = vpop.permute.xlu0 %414
          %v418 = vsel %vm388, %v411, 0
          %420 = vmatpush.bf16.msra.mxu0 0
          %421 = vmatpush.bf16.msra.mxu0 0
          %422 = vmatpush.bf16.msra.mxu0 0
          %423 = vmatpush.bf16.msra.mxu0 0
          %424 = vmatpush.bf16.msra.mxu0 0
          %425 = vmatpush.bf16.msra.mxu0 0
          %426 = vmatpush.bf16.msra.mxu0 0
          %427 = vmatpush.bf16.msra.mxu0 %v415
          %428 = vmatmul.bf16.gmra.mxu0 %v418
          %v429 = vpop.f32.mrf.mxu0
          %v430 = vadd.f32 0.0, %v429
          %v431 = vpop.f32.mrf.mxu0
          %v432 = vadd.f32 0.0, %v431
          %433 = vdwg.mxu0
          %s434 = scalar_lea.vmem %s5, 16
          %v435 = vld [vmem:[%s434] sm:$0xff]
          %v436 = vld [vmem:[%s434 + $0x8] sm:$0xff]
          %437 = vrot.lane.b32.xlu0 %v346, 120
          %v438 = vpop.permute.xlu0 %437
          %439 = vrot.lane.b32.xlu0 %v347, 120
          %v440 = vpop.permute.xlu0 %439
          %441 = vrot.lane.b32.xlu0 %v346, 88
          %v442 = vpop.permute.xlu0 %441
          %443 = vrot.lane.b32.xlu0 %v347, 88
          %v444 = vpop.permute.xlu0 %443
          %v445 = vsel %vm356, %v438, 0
          %v447 = vsel %vm356, %v440, 0
          %v449 = vsel %vm356, %v442, 0
          %v451 = vsel %vm356, %v444, 0
          %453 = vmatpush.xpose.msra.mxu0 0.0
          %454 = vmatpush.xpose.msra.mxu0 0.0
          %455 = vmatpush.xpose.msra.mxu0 0.0
          %456 = vmatpush.xpose.msra.mxu0 0.0
          %457 = vmatpush.xpose.msra.mxu0 0.0
          %458 = vmatpush.xpose.msra.mxu0 0.0
          %459 = vmatpush.xpose.msra.mxu0 0.0
          %460 = vmatpush.xpose.msra.mxu0 0.0
          %461 = vmatpush.xpose.msra.mxu0 0.0
          %462 = vmatpush.xpose.msra.mxu0 0.0
          %463 = vmatpush.xpose.msra.mxu0 0.0
          %464 = vmatpush.xpose.msra.mxu0 0.0
          %465 = vmatpush.xpose.msra.mxu0 0.0
          %466 = vmatpush.xpose.msra.mxu0 0.0
          %467 = vmatpush.xpose.msra.mxu0 %v451
          %468 = vmatpush.xpose.msra.mxu0 %v449
          %469 = vmatmul.f32.gmra.mxu0 %v445
          %v470 = vpop.f32.mrf.mxu0
          %v471 = vadd.f32 %v435, %v470
          %472 = vmatmul.f32.gmra.mxu0 %v447
          %v473 = vpop.f32.mrf.mxu0
          %v474 = vadd.f32 %v436, %v473
          %475 = vdwg.mxu0
          %v476 = vsel %vm388, %v471, -inf
          %477 = vmax.xlane.f32.xlu0 %v476
          %v478 = vpop.xlane.xlu0 %477
          %v479 = vsel %vm388, %v474, -inf
          %480 = vmax.xlane.f32.xlu0 %v479
          %v481 = vpop.xlane.xlu0 %480
          %v482 = vsub.f32 %v471, %v478
          %v483 = vsub.f32 %v474, %v481
          %v484 = vmul.f32 %v482, 1.442695
          %v485 = vpow.pop %v484
          %v486 = vmul.f32 %v483, 1.442695
          %v487 = vpow.pop %v486
          %v488 = vsel %vm388, %v485, 0.0
          %489 = vadd.xlane.f32.xlu0 %v488
          %v490 = vpop.xlane.xlu0 %489
          %v491 = vsel %vm388, %v487, 0.0
          %492 = vadd.xlane.f32.xlu0 %v491
          %v493 = vpop.xlane.xlu0 %492
          %v494 = vrcp.pop %v490
          %v495 = vrcp.pop %v493
          %v496 = vmul.f32 %v485, %v494
          %v497 = vmul.f32 %v487, %v495
          %v498 = vpack.c.bf16 %v497, %v496
          %499 = vrot.lane.b32.xlu0 %v412, 56
          %v500 = vpop.permute.xlu0 %499
          %v503 = vsel %vm388, %v498, 0
          %505 = vmatpush.bf16.msra.mxu0 0
          %506 = vmatpush.bf16.msra.mxu0 0
          %507 = vmatpush.bf16.msra.mxu0 0
          %508 = vmatpush.bf16.msra.mxu0 0
          %509 = vmatpush.bf16.msra.mxu0 0
          %510 = vmatpush.bf16.msra.mxu0 0
          %511 = vmatpush.bf16.msra.mxu0 0
          %512 = vmatpush.bf16.msra.mxu0 %v500
          %513 = vmatmul.bf16.gmra.mxu0 %v503
          %v514 = vpop.f32.mrf.mxu0
          %v515 = vadd.f32 0.0, %v514
          %v516 = vpop.f32.mrf.mxu0
          %v517 = vadd.f32 0.0, %v516
          %518 = vdwg.mxu0
          %s519 = scalar_lea.vmem %s5, 32
          %v520 = vld [vmem:[%s519] sm:$0xff]
          %v521 = vld [vmem:[%s519 + $0x8] sm:$0xff]
          %522 = vrot.lane.b32.xlu0 %v346, 112
          %v523 = vpop.permute.xlu0 %522
          %524 = vrot.lane.b32.xlu0 %v347, 112
          %v525 = vpop.permute.xlu0 %524
          %526 = vrot.lane.b32.xlu0 %v346, 80
          %v527 = vpop.permute.xlu0 %526
          %528 = vrot.lane.b32.xlu0 %v347, 80
          %v529 = vpop.permute.xlu0 %528
          %v530 = vsel %vm356, %v523, 0
          %v532 = vsel %vm356, %v525, 0
          %v534 = vsel %vm356, %v527, 0
          %v536 = vsel %vm356, %v529, 0
          %538 = vmatpush.xpose.msra.mxu0 0.0
          %539 = vmatpush.xpose.msra.mxu0 0.0
          %540 = vmatpush.xpose.msra.mxu0 0.0
          %541 = vmatpush.xpose.msra.mxu0 0.0
          %542 = vmatpush.xpose.msra.mxu0 0.0
          %543 = vmatpush.xpose.msra.mxu0 0.0
          %544 = vmatpush.xpose.msra.mxu0 0.0
          %545 = vmatpush.xpose.msra.mxu0 0.0
          %546 = vmatpush.xpose.msra.mxu0 0.0
          %547 = vmatpush.xpose.msra.mxu0 0.0
          %548 = vmatpush.xpose.msra.mxu0 0.0
          %549 = vmatpush.xpose.msra.mxu0 0.0
          %550 = vmatpush.xpose.msra.mxu0 0.0
          %551 = vmatpush.xpose.msra.mxu0 0.0
          %552 = vmatpush.xpose.msra.mxu0 %v536
          %553 = vmatpush.xpose.msra.mxu0 %v534
          %554 = vmatmul.f32.gmra.mxu0 %v530
          %v555 = vpop.f32.mrf.mxu0
          %v556 = vadd.f32 %v520, %v555
          %557 = vmatmul.f32.gmra.mxu0 %v532
          %v558 = vpop.f32.mrf.mxu0
          %v559 = vadd.f32 %v521, %v558
          %560 = vdwg.mxu0
          %v561 = vsel %vm388, %v556, -inf
          %562 = vmax.xlane.f32.xlu0 %v561
          %v563 = vpop.xlane.xlu0 %562
          %v564 = vsel %vm388, %v559, -inf
          %565 = vmax.xlane.f32.xlu0 %v564
          %v566 = vpop.xlane.xlu0 %565
          %v567 = vsub.f32 %v556, %v563
          %v568 = vsub.f32 %v559, %v566
          %v569 = vmul.f32 %v567, 1.442695
          %v570 = vpow.pop %v569
          %v571 = vmul.f32 %v568, 1.442695
          %v572 = vpow.pop %v571
          %v573 = vsel %vm388, %v570, 0.0
          %574 = vadd.xlane.f32.xlu0 %v573
          %v575 = vpop.xlane.xlu0 %574
          %v576 = vsel %vm388, %v572, 0.0
          %577 = vadd.xlane.f32.xlu0 %v576
          %v578 = vpop.xlane.xlu0 %577
          %v579 = vrcp.pop %v575
          %v580 = vrcp.pop %v578
          %v581 = vmul.f32 %v570, %v579
          %v582 = vmul.f32 %v572, %v580
          %v583 = vpack.c.bf16 %v582, %v581
          %584 = vrot.lane.b32.xlu0 %v412, 48
          %v585 = vpop.permute.xlu0 %584
          %v588 = vsel %vm388, %v583, 0
          %590 = vmatpush.bf16.msra.mxu0 0
          %591 = vmatpush.bf16.msra.mxu0 0
          %592 = vmatpush.bf16.msra.mxu0 0
          %593 = vmatpush.bf16.msra.mxu0 0
          %594 = vmatpush.bf16.msra.mxu0 0
          %595 = vmatpush.bf16.msra.mxu0 0
          %596 = vmatpush.bf16.msra.mxu0 0
          %597 = vmatpush.bf16.msra.mxu0 %v585
          %598 = vmatmul.bf16.gmra.mxu0 %v588
          %v599 = vpop.f32.mrf.mxu0
          %v600 = vadd.f32 0.0, %v599
          %v601 = vpop.f32.mrf.mxu0
          %v602 = vadd.f32 0.0, %v601
          %603 = vdwg.mxu0
          %s604 = scalar_lea.vmem %s5, 48
          %v605 = vld [vmem:[%s604] sm:$0xff]
          %v606 = vld [vmem:[%s604 + $0x8] sm:$0xff]
          %607 = vrot.lane.b32.xlu0 %v346, 104
          %v608 = vpop.permute.xlu0 %607
          %609 = vrot.lane.b32.xlu0 %v347, 104
          %v610 = vpop.permute.xlu0 %609
          %611 = vrot.lane.b32.xlu0 %v346, 72
          %v612 = vpop.permute.xlu0 %611
          %613 = vrot.lane.b32.xlu0 %v347, 72
          %v614 = vpop.permute.xlu0 %613
          %v615 = vsel %vm356, %v608, 0
          %v617 = vsel %vm356, %v610, 0
          %v619 = vsel %vm356, %v612, 0
          %v621 = vsel %vm356, %v614, 0
          %623 = vmatpush.xpose.msra.mxu0 0.0
          %624 = vmatpush.xpose.msra.mxu0 0.0
          %625 = vmatpush.xpose.msra.mxu0 0.0
          %626 = vmatpush.xpose.msra.mxu0 0.0
          %627 = vmatpush.xpose.msra.mxu0 0.0
          %628 = vmatpush.xpose.msra.mxu0 0.0
          %629 = vmatpush.xpose.msra.mxu0 0.0
          %630 = vmatpush.xpose.msra.mxu0 0.0
          %631 = vmatpush.xpose.msra.mxu0 0.0
          %632 = vmatpush.xpose.msra.mxu0 0.0
          %633 = vmatpush.xpose.msra.mxu0 0.0
          %634 = vmatpush.xpose.msra.mxu0 0.0
          %635 = vmatpush.xpose.msra.mxu0 0.0
          %636 = vmatpush.xpose.msra.mxu0 0.0
          %637 = vmatpush.xpose.msra.mxu0 %v621
          %638 = vmatpush.xpose.msra.mxu0 %v619
          %639 = vmatmul.f32.gmra.mxu0 %v615
          %v640 = vpop.f32.mrf.mxu0
          %v641 = vadd.f32 %v605, %v640
          %642 = vmatmul.f32.gmra.mxu0 %v617
          %v643 = vpop.f32.mrf.mxu0
          %v644 = vadd.f32 %v606, %v643
          %645 = vdwg.mxu0
          %v646 = vsel %vm388, %v641, -inf
          %647 = vmax.xlane.f32.xlu0 %v646
          %v648 = vpop.xlane.xlu0 %647
          %v649 = vsel %vm388, %v644, -inf
          %650 = vmax.xlane.f32.xlu0 %v649
          %v651 = vpop.xlane.xlu0 %650
          %v652 = vsub.f32 %v641, %v648
          %v653 = vsub.f32 %v644, %v651
          %v654 = vmul.f32 %v652, 1.442695
          %v655 = vpow.pop %v654
          %v656 = vmul.f32 %v653, 1.442695
          %v657 = vpow.pop %v656
          %v658 = vsel %vm388, %v655, 0.0
          %659 = vadd.xlane.f32.xlu0 %v658
          %v660 = vpop.xlane.xlu0 %659
          %v661 = vsel %vm388, %v657, 0.0
          %662 = vadd.xlane.f32.xlu0 %v661
          %v663 = vpop.xlane.xlu0 %662
          %v664 = vrcp.pop %v660
          %v665 = vrcp.pop %v663
          %v666 = vmul.f32 %v655, %v664
          %v667 = vmul.f32 %v657, %v665
          %v668 = vpack.c.bf16 %v667, %v666
          %669 = vrot.lane.b32.xlu0 %v412, 40
          %v670 = vpop.permute.xlu0 %669
          %v673 = vsel %vm388, %v668, 0
          %675 = vmatpush.bf16.msra.mxu0 0
          %676 = vmatpush.bf16.msra.mxu0 0
          %677 = vmatpush.bf16.msra.mxu0 0
          %678 = vmatpush.bf16.msra.mxu0 0
          %679 = vmatpush.bf16.msra.mxu0 0
          %680 = vmatpush.bf16.msra.mxu0 0
          %681 = vmatpush.bf16.msra.mxu0 0
          %682 = vmatpush.bf16.msra.mxu0 %v670
          %683 = vmatmul.bf16.gmra.mxu0 %v673
          %v684 = vpop.f32.mrf.mxu0
          %v685 = vadd.f32 0.0, %v684
          %v686 = vpop.f32.mrf.mxu0
          %v687 = vadd.f32 0.0, %v686
          %688 = vdwg.mxu0
          %691 = vrot.lane.b32.xlu0 %v515, 8
          %v692 = vpop.permute.xlu0 %691
          %693 = vrot.lane.b32.xlu0 %v517, 8
          %v694 = vpop.permute.xlu0 %693
          %699 = vrot.lane.b32.xlu0 %v600, 16
          %v700 = vpop.permute.xlu0 %699
          %701 = vrot.lane.b32.xlu0 %v602, 16
          %v702 = vpop.permute.xlu0 %701
          %707 = vrot.lane.b32.xlu0 %v685, 24
          %v708 = vpop.permute.xlu0 %707
          %709 = vrot.lane.b32.xlu0 %v687, 24
          %v710 = vpop.permute.xlu0 %709
          %v713 = vsel %vm356, %v430, %v692
          %v714 = vsel %vm356, %v432, %v694
          %v715 = vsel %vm388, %v713, %v700
          %v716 = vsel %vm388, %v714, %v702
          %vm717 = vcmask 195584
          %v718 = vsel %vm717, %v715, %v708
          %v719 = vsel %vm717, %v716, %v710
          %v720 = vpack.c.bf16 %v718, %v718
          %v721 = vpack.c.bf16 %v719, %v719
          %s722 = sshra.s32 %s344, 3
          %s723 = sand.u32 %s344, 7
          %s724 = smul.addr %s722, 4
          %s725 = scalar_lea.vmem [#allocation3], %s724
          %vm726 = vcmask 257024
          %727 = vst.msk [vmem:[%s725] sm:$0xf] %vm726, %v720
          %728 = vst.msk [vmem:[%s725 + $0x4] sm:$0xf] %vm726, %v721
        $region53: #{tpu_custom_call.1} parent=43 // loop_footer
          %s343 = sadd.s32 1, %s339
        $region54: #{tpu_custom_call.1} parent=43 // loop_footer_branch
          %338 = sbr.rel target = $region50
        $region55: #{tpu_custom_call.1} parent=43 // loop_exit
          _
        %v729 = vld [vmem:[#allocation3] sm:$0xf]
        %v730 = vld [vmem:[#allocation3 + $0x4] sm:$0xf]
        %v731 = vld [vmem:[#allocation3 + $0x8] sm:$0xf]
        %v732 = vld [vmem:[#allocation3 + $0xc] sm:$0xf]
        %v733 = vld [vmem:[#allocation4] sm:$0xf]
        %v734 = vld [vmem:[#allocation4 + $0x4] sm:$0xf]
        %v735 = vld [vmem:[#allocation4 + $0x8] sm:$0xf]
        %v736 = vld [vmem:[#allocation4 + $0xc] sm:$0xf]
        %v737 = vld [vmem:[%s4] sm:$0x1]
        %v739 = vperm.slane %v737, 0
        %v745 = vunpack.c.l.b16 %v729
        %v746 = vunpack.c.l.b16 %v730
        %v747 = vunpack.c.l.b16 %v731
        %v748 = vunpack.c.l.b16 %v732
        %v749 = vpack.c.b16 %v746, %v745
        %v750 = vpack.c.b16 %v748, %v747
        %v755 = vunpack.c.l.b16 %v733
        %v756 = vunpack.c.l.b16 %v734
        %v757 = vunpack.c.l.b16 %v735
        %v758 = vunpack.c.l.b16 %v736
        %v759 = vpack.c.b16 %v756, %v755
        %v760 = vpack.c.b16 %v758, %v757
        %v764 = vsel %vm307, %v749, 0
        %v767 = vsel %vm307, %v750, 0
        %769 = vmatpush.bf16.msra.mxu0 0
        %770 = vmatpush.bf16.msra.mxu0 0
        %771 = vmatpush.bf16.msra.mxu0 0
        %772 = vmatpush.bf16.msra.mxu0 0
        %773 = vmatpush.bf16.msra.mxu0 0
        %774 = vmatpush.bf16.msra.mxu0 0
        %775 = vmatpush.bf16.msra.mxu0 %v760
        %776 = vmatpush.bf16.msra.mxu0 %v759
        %777 = vmatmul.bf16.gmra.mxu0 %v764
        %v778 = vpop.f32.mrf.mxu0
        %v779 = vadd.f32 %v739, %v778
        %v780 = vpop.f32.mrf.mxu0
        %v781 = vadd.f32 %v739, %v780
        %782 = vmatmul.bf16.gmra.mxu0 %v767
        %v783 = vpop.f32.mrf.mxu0
        %v784 = vadd.f32 %v739, %v783
        %v785 = vpop.f32.mrf.mxu0
        %v786 = vadd.f32 %v739, %v785
        %787 = vdwg.mxu0
        %788 = vst.msk [vmem:[%s270] sm:$0xff] %vm307, %v779
        %789 = vst.msk [vmem:[%s270 + $0x8] sm:$0xff] %vm307, %v781
        %790 = vst.msk [vmem:[%s270 + $0x10] sm:$0xff] %vm307, %v784
        %791 = vst.msk [vmem:[%s270 + $0x18] sm:$0xff] %vm307, %v786
        %s792 = smul.u32 4, %s18
        %p793 = scmp.lt.s32.totalorder %s792, 15
        %s794 = scalar_select %p793, %s792, 15
        %s795 = smul.addr %s794, 8
        %s796 = scalar_lea.vmem %s6, %s795
        // Predicated region
        $region56: #{tpu_custom_call.1} parent=43 // pred_check
          %p797 = pneg %p167
        $region57: #{tpu_custom_call.1} parent=43 // pred_check_branch
          %799 = sbr.rel (%p797) target = $region59
        $region58: #{tpu_custom_call.1} parent=43 // pred_region
          %s800 = smul.u32 4, %s18
        $region59: #{tpu_custom_call.1} parent=43 // pred_fallthru
          _
      $region44: #{tpu_custom_call.1} parent=5 // pred_fallthru
        _
      %p801 = scmp.le.s32.totalorder 2, %s13
      // Predicated region
      $region60: #{tpu_custom_call.1} parent=5 // pred_check
        %p802 = pneg %p801
      $region61: #{tpu_custom_call.1} parent=5 // pred_check_branch
        %804 = sbr.rel (%p802) target = $region63
      $region62: #{tpu_custom_call.1} parent=5 // pred_region
        %s805 = ssub.s32 %s13, 2
        // Predicated region
        $region64: #{tpu_custom_call.1} parent=62 // pred_check
          %p806 = pneg %p173
        $region65: #{tpu_custom_call.1} parent=62 // pred_check_branch
          %808 = sbr.rel (%p806) target = $region67
        $region66: #{tpu_custom_call.1} parent=62 // pred_region
          %s809 = smul.u32 4, %s19
          %p810 = scmp.lt.s32.totalorder %s809, 15
          %s811 = scalar_select %p810, %s809, 15
          %s812 = smul.addr %s811, 8
          %s813 = scalar_lea.vmem %s6, %s812
        $region67: #{tpu_custom_call.1} parent=62 // pred_fallthru
          _
      $region63: #{tpu_custom_call.1} parent=5 // pred_fallthru
        _
    $region6: #{tpu_custom_call.1} parent=1 // loop_footer
      %s17 = sadd.s32 1, %s13
    $region7: #{tpu_custom_call.1} parent=1 // loop_footer_branch
      %12 = sbr.rel target = $region3
    $region8: #{tpu_custom_call.1} parent=1 // loop_exit
      _
    %814 = vsyncpa [#allocation5], 1
    %s815 = scalar_lea.sflag [#allocation5], 1
    %816 = vsyncpa %s815, 1

</llo_original>
